<compile_context>
chip_gen: v6e
topology: v6e:2x2x1
jax: 0.10.0
libtpu: 0.0.40
codegen_flags: <defaults>
</compile_context>

<pallas_src>
import jax
import jax.numpy as jnp
import numpy as np
from jax.experimental import pallas as pl
from jax.experimental.pallas import tpu as pltpu

_BN_EPS = 1e-5


def _round_up(a, m):
    return (a + m - 1) // m * m


def _choose_tile(bn, target):
    """Voxel rows per grid step: multiple of 8, no larger than the padded problem."""
    target = max(8, int(target))
    return min(_round_up(target, 8), _round_up(bn, 8))


# --------------------------------------------------------------------------- #
# Phase 1: per-tile partial BN statistics (sum / sum-of-squares of relu(xW+b)).
# --------------------------------------------------------------------------- #
def _make_stats_kernel(bn_valid, tile_rows, needs_mask):
    def kernel(x_ref, w_ref, b_ref, stats_ref):
        # (G, T*Cin) @ (T*Cin, T*2*Cout) on the MXU, f32 accumulation.
        y = jnp.dot(x_ref[...], w_ref[...], preferred_element_type=jnp.float32)
        y = jnp.maximum(y + b_ref[...], 0.0)
        if needs_mask:
            row = (jax.lax.broadcasted_iota(jnp.int32, (tile_rows, 1), 0)
                   + pl.program_id(0) * tile_rows)
            y_m = y * (row < bn_valid).astype(jnp.float32)
        else:
            y_m = y
        s1 = jnp.sum(y_m, axis=0, keepdims=True)        # (1, T*2*Cout)
        q1 = jnp.sum(y_m * y, axis=0, keepdims=True)    # (1, T*2*Cout)
        stats_ref[...] = jnp.concatenate([s1, q1], axis=0)[None]   # (1, 2, W)

    return kernel


# --------------------------------------------------------------------------- #
# Phase 2: recompute + folded BN scale/shift + lane-roll max + one dense store.
# --------------------------------------------------------------------------- #
def _make_out_kernel(t_samples, cout):
    period = 2 * cout

    def kernel(x_ref, w_ref, b_ref, scale_ref, shift_ref, o_ref):
        y = jnp.dot(x_ref[...], w_ref[...], preferred_element_type=jnp.float32)
        y = jnp.maximum(y + b_ref[...], 0.0)
        y = y * scale_ref[...] + shift_ref[...]          # (G, T*2*Cout), [y_t|y_t] groups
        # Max over samples: tree of circular lane rolls with period 2*Cout.
        # After ceil(log2(T)) steps every lane holds the max over its residue
        # class mod 2*Cout, i.e. the per-channel max over all T samples.
        s = y
        n = 1
        while n < t_samples:
            s = jnp.maximum(s, pltpu.roll(s, shift=n * period, axis=1))
            n *= 2
        lane = jax.lax.broadcasted_iota(jnp.int32, (1, y.shape[1]), 1)
        keep_y = (lane % period) < cout                  # first half of each group = y_t
        o_ref[...] = jnp.where(keep_y, y, s).astype(o_ref.dtype)

    return kernel


# --------------------------------------------------------------------------- #
# Wrapper
# --------------------------------------------------------------------------- #
def vfe_forward(x, w, b, gamma, beta, *, voxels_per_tile=1024,
                compute_dtype=jnp.bfloat16, out_dtype=jnp.float32):
    """x: (B, N, T, Cin); w: (Cin, Cout) (transposed PyTorch fc weight);
    b/gamma/beta: (1, Cout). Returns (B, N, T, 2*Cout)."""
    B, N, T, Cin = x.shape
    Cout = w.shape[1]
    K = T * Cin                 # packed input lanes (128 for Cin=16, T=8)
    W_out = T * 2 * Cout        # packed output lanes (512 for Cout=32, T=8)
    BN = B * N
    M = BN * T                  # true BN-statistics population

    G = _choose_tile(BN, voxels_per_tile)
    BN_pad = _round_up(BN, G)
    num_tiles = BN_pad // G
    needs_mask = BN_pad != BN

    # Lane-packed input: one voxel row carries all T samples.
    x2 = x.reshape(BN, K)
    if needs_mask:
        x2 = jnp.pad(x2, ((0, BN_pad - BN), (0, 0)))
    x2 = x2.astype(compute_dtype)

    # Block-diagonal, channel-duplicated weight:
    #   y_wide[:, t*2C:(t+1)*2C] = [x_t @ W | x_t @ W]
    w_dup = jnp.concatenate([w, w], axis=1).astype(jnp.float32)          # (Cin, 2C)
    w_wide = (jnp.eye(T, dtype=jnp.float32)[:, None, :, None]
              * w_dup[None, :, None, :]).reshape(K, W_out).astype(compute_dtype)
    b_wide = jnp.tile(b.reshape(1, Cout).astype(jnp.float32), (1, 2 * T))  # (1, W)

    x_spec = pl.BlockSpec((G, K), lambda i: (i, 0))
    w_spec = pl.BlockSpec((K, W_out), lambda i: (0, 0))          # resident
    vec_spec = pl.BlockSpec((1, W_out), lambda i: (0, 0))        # resident

    # VMEM budget: double-buffered in/out tiles + ~4 f32 copies of the wide
    # activation + resident params, 2x margin, capped under v7x's 64 MiB.
    ein = jnp.dtype(compute_dtype).itemsize
    eout = jnp.dtype(out_dtype).itemsize
    need = (2 * G * K * ein + 2 * G * W_out * eout
            + 4 * G * W_out * 4 + K * W_out * ein + 4 * W_out * 4)
    vmem_limit = int(min(2 * need, 48 << 20)) if need > (12 << 20) else None
    cparams = pltpu.CompilerParams(dimension_semantics=("parallel",),
                                   vmem_limit_bytes=vmem_limit)

    # ---- phase 1: per-tile partial sums (parallel grid -> megacore-friendly) ----
    stats = pl.pallas_call(
        _make_stats_kernel(BN, G, needs_mask),
        out_shape=jax.ShapeDtypeStruct((num_tiles, 2, W_out), jnp.float32),
        grid_spec=pltpu.PrefetchScalarGridSpec(
            num_scalar_prefetch=0,
            grid=(num_tiles,),
            in_specs=[x_spec, w_spec, vec_spec],
            out_specs=pl.BlockSpec((1, 2, W_out), lambda i: (i, 0, 0)),
        ),
        compiler_params=cparams,
    )(x2, w_wide, b_wide)

    # ---- tiny cross-tile reduction + BN fold in plain JAX (f32) ----
    lane_sum = jnp.sum(stats[:, 0, :], axis=0)                   # (W_out,)
    lane_sq = jnp.sum(stats[:, 1, :], axis=0)
    ch_sum = lane_sum.reshape(2 * T, Cout).sum(axis=0) * 0.5     # undo channel dup
    ch_sq = lane_sq.reshape(2 * T, Cout).sum(axis=0) * 0.5
    mean = ch_sum / M
    var = ch_sq / M - mean * mean                                # biased (training BN)
    inv = jax.lax.rsqrt(var + _BN_EPS)
    scale = gamma.reshape(Cout).astype(jnp.float32) * inv
    shift = beta.reshape(Cout).astype(jnp.float32) - mean * scale
    scale_wide = jnp.tile(scale, 2 * T).reshape(1, W_out)
    shift_wide = jnp.tile(shift, 2 * T).reshape(1, W_out)

    # ---- phase 2: recompute + folded BN + roll-max + single dense store ----
    out_flat = pl.pallas_call(
        _make_out_kernel(T, Cout),
        out_shape=jax.ShapeDtypeStruct((BN_pad, W_out), out_dtype),
        grid_spec=pltpu.PrefetchScalarGridSpec(
            num_scalar_prefetch=0,
            grid=(num_tiles,),
            in_specs=[x_spec, w_spec, vec_spec, vec_spec, vec_spec],
            out_specs=pl.BlockSpec((G, W_out), lambda i: (i, 0)),
        ),
        compiler_params=cparams,
    )(x2, w_wide, b_wide, scale_wide, shift_wide)

    if needs_mask:
        out_flat = out_flat[:BN]
    return out_flat.reshape(B, N, T, 2 * Cout)


# --------------------------------------------------------------------------- #
# Pure-JAX reference matching PyTorch VFE.forward (training-mode BN, f32).
# --------------------------------------------------------------------------- #
def vfe_reference(x, w, b, gamma, beta):
    B, N, T, Cin = x.shape
    Cout = w.shape[1]
    y = jnp.dot(x.reshape(-1, Cin).astype(jnp.float32), w.astype(jnp.float32),
                precision=jax.lax.Precision.HIGHEST) + b.reshape(1, Cout)
    y = jnp.maximum(y, 0.0)
    mean = jnp.mean(y, axis=0, keepdims=True)
    var = jnp.mean((y - mean) ** 2, axis=0, keepdims=True)
    y = (y - mean) / jnp.sqrt(var + _BN_EPS) * gamma.reshape(1, Cout) + beta.reshape(1, Cout)
    y = y.reshape(B, N, T, Cout)
    s = jnp.max(y, axis=2, keepdims=True)
    s = jnp.broadcast_to(s, (B, N, T, Cout))
    return jnp.concatenate([y, s], axis=-1)


if __name__ == "__main__":
    # Shapes consistent with the module: sampleNum must equal T (dim=2).
    B, N, T = 2, 16, 8
    Cin, Cout = 16, 32

    key = jax.random.PRNGKey(0)
    kx, kw, kb, kx2 = jax.random.split(key, 4)

    x = jax.random.normal(kx, (B, N, T, Cin), dtype=jnp.float32)
    bound = 1.0 / np.sqrt(Cin)
    w = jax.random.uniform(kw, (Cin, Cout), jnp.float32, -bound, bound)   # fc weight^T
    b = jax.random.uniform(kb, (1, Cout), jnp.float32, -bound, bound)     # fc bias
    gamma = jnp.ones((1, Cout), jnp.float32)                              # bn weight
    beta = jnp.zeros((1, Cout), jnp.float32)                              # bn bias

    # bf16-rounded copies of the tensors the kernel quantizes (the bf16 cast is
    # the intended HBM-traffic optimization) so kernel math is checked tightly.
    x_q = x.astype(jnp.bfloat16).astype(jnp.float32)
    w_q = w.astype(jnp.bfloat16).astype(jnp.float32)

    # Case 1: BN divisible by the tile -> 4 grid steps, no padding.
    out = jax.block_until_ready(vfe_forward(x, w, b, gamma, beta, voxels_per_tile=8))
    assert out.shape == (B, N, T, 2 * Cout), out.shape
    ref_q = vfe_reference(x_q, w_q, b, gamma, beta)
    np.testing.assert_allclose(np.asarray(out), np.asarray(ref_q), rtol=5e-3, atol=5e-3)
    ref = vfe_reference(x, w, b, gamma, beta)
    np.testing.assert_allclose(np.asarray(out), np.asarray(ref), rtol=6e-2, atol=6e-2)

    # Case 2: awkward voxel count (BN = 26) -> padded rows + masked statistics.
    N2 = 13
    xb = jax.random.normal(kx2, (B, N2, T, Cin), dtype=jnp.float32)
    out2 = jax.block_until_ready(vfe_forward(xb, w, b, gamma, beta))
    assert out2.shape == (B, N2, T, 2 * Cout), out2.shape
    xb_q = xb.astype(jnp.bfloat16).astype(jnp.float32)
    ref2_q = vfe_reference(xb_q, w_q, b, gamma, beta)
    np.testing.assert_allclose(np.asarray(out2), np.asarray(ref2_q), rtol=5e-3, atol=5e-3)

    print("KERNEL_OK")
</pallas_src>

<mosaic_0001>
module attributes {stable_mosaic.version = 11 : i64} {
  func.func @kernel(%arg0: i32, %arg1: memref<8x128xbf16, #tpu.memory_space<vmem>>, %arg2: memref<128x512xbf16, #tpu.memory_space<vmem>>, %arg3: memref<1x512xf32, #tpu.memory_space<vmem>>, %arg4: memref<1x2x512xf32, #tpu.memory_space<vmem>>) attributes {dimension_semantics = [#tpu.dimension_semantics<parallel>], iteration_bounds = array<i64: 4>, scalar_prefetch = 0 : i64, scratch_operands = 0 : i64, tpu.core_type = #tpu.core_type<tc>, window_params = [{transform_indices = @transform_0, window_bounds = array<i64: 8, 128>}, {pipeline_mode = #tpu.pipeline_mode<synchronous>, transform_indices = @transform_1, window_bounds = array<i64: 128, 512>}, {pipeline_mode = #tpu.pipeline_mode<synchronous>, transform_indices = @transform_2, window_bounds = array<i64: 1, 512>}, {transform_indices = @transform_3, window_bounds = array<i64: 1, 2, 512>}]} {
    %c0 = arith.constant 0 : index
    %c0_0 = arith.constant 0 : index
    %0 = vector.load %arg1[%c0, %c0_0] : memref<8x128xbf16, #tpu.memory_space<vmem>>, vector<8x128xbf16>
    %c0_1 = arith.constant 0 : index
    %c0_2 = arith.constant 0 : index
    %1 = vector.load %arg2[%c0_1, %c0_2] : memref<128x512xbf16, #tpu.memory_space<vmem>>, vector<128x512xbf16>
    %cst = arith.constant dense<0.000000e+00> : vector<8x512xf32>
    %2 = tpu.matmul %0, %1, %cst {dimension_numbers = #tpu.dot_dimension_numbers<[1], [0], [0], [1], [0, 0, 1, 1], [], []>} : vector<8x128xbf16>, vector<128x512xbf16>, vector<8x512xf32> -> vector<8x512xf32>
    %c0_3 = arith.constant 0 : index
    %c0_4 = arith.constant 0 : index
    %3 = vector.load %arg3[%c0_3, %c0_4] : memref<1x512xf32, #tpu.memory_space<vmem>>, vector<1x512xf32>
    %4 = vector.broadcast %3 : vector<1x512xf32> to vector<8x512xf32>
    %5 = arith.addf %2, %4 : vector<8x512xf32>
    %cst_5 = arith.constant 0.000000e+00 : f32
    %6 = vector.broadcast %cst_5 : f32 to vector<8x512xf32>
    %7 = arith.maximumf %5, %6 : vector<8x512xf32>
    %cst_6 = arith.constant dense<0.000000e+00> : vector<512xf32>
    %8 = vector.multi_reduction <add>, %7, %cst_6 [0] : vector<8x512xf32> to vector<512xf32>
    %9 = vector.shape_cast %8 : vector<512xf32> to vector<1x512xf32>
    %10 = arith.mulf %7, %7 : vector<8x512xf32>
    %cst_7 = arith.constant dense<0.000000e+00> : vector<512xf32>
    %11 = vector.multi_reduction <add>, %10, %cst_7 [0] : vector<8x512xf32> to vector<512xf32>
    %12 = vector.shape_cast %11 : vector<512xf32> to vector<1x512xf32>
    %13 = tpu.concatenate %9, %12 in 0 : vector<1x512xf32>, vector<1x512xf32> -> vector<2x512xf32>
    %14 = vector.shape_cast %13 : vector<2x512xf32> to vector<1x2x512xf32>
    %c0_8 = arith.constant 0 : index
    %c0_9 = arith.constant 0 : index
    %c0_10 = arith.constant 0 : index
    %15 = vector.load %arg4[%c0_8, %c0_9, %c0_10] : memref<1x2x512xf32, #tpu.memory_space<vmem>>, vector<1x2x512xf32>
    tpu.vector_store %arg4[%c0_8, %c0_9, %c0_10], %14 {strides = array<i32>} : memref<1x2x512xf32, #tpu.memory_space<vmem>>, vector<1x2x512xf32>,
    return
  }
  func.func @transform_0(%arg0: i32) -> (i32, i32) {
    %c0_i32 = arith.constant 0 : i32
    %c0_i32_0 = arith.constant 0 : i32
    return %arg0, %c0_i32 : i32, i32
  }
  func.func @transform_1(%arg0: i32) -> (i32, i32) {
    %c0_i32 = arith.constant 0 : i32
    %c0_i32_0 = arith.constant 0 : i32
    %c0_i32_1 = arith.constant 0 : i32
    return %c0_i32, %c0_i32_0 : i32, i32
  }
  func.func @transform_2(%arg0: i32) -> (i32, i32) {
    %c0_i32 = arith.constant 0 : i32
    %c0_i32_0 = arith.constant 0 : i32
    %c0_i32_1 = arith.constant 0 : i32
    return %c0_i32, %c0_i32_0 : i32, i32
  }
  func.func @transform_3(%arg0: i32) -> (i32, i32, i32) {
    %c0_i32 = arith.constant 0 : i32
    %c0_i32_0 = arith.constant 0 : i32
    %c0_i32_1 = arith.constant 0 : i32
    return %arg0, %c0_i32, %c0_i32_0 : i32, i32, i32
  }
}

</mosaic_0001>

<llo_original>
// kernel: tpu_custom_call.1
$region0: #{tpu_custom_call.1}
  #allocation0 [shape = 'u32[]', space=smem, size = 0x4, offset = 0x4, fixed_abs, tag = 'smem constant byte address 0x4 - core index']
  #allocation1 [shape = 'u32[144,128]{1,0:T(1,128)}', space=vmem, size = 0x12000, scoped, tag = 'internal scratch']
  %s0 = inlined_call_operand.hbm [shape: bf16[32,128], index: 0, kind: input, shape index: {}]
  %s1 = inlined_call_operand.hbm [shape: bf16[128,512], index: 1, kind: input, shape index: {}]
  %s2 = inlined_call_operand.hbm [shape: f32[1,512], index: 2, kind: input, shape index: {}]
  %s3 = inlined_call_operand.hbm [shape: f32[4,2,512], index: 3, kind: output, shape index: {}]
  %s4 = sld [smem:[#allocation0]]
  $region57: #{tpu_custom_call.1} parent=0
    _
  %s6 = ssub.s32 1, %s4
  %s7 = scalar_select 0, %s6, %s4
  $region1: #{tpu_custom_call.1} parent=0
    #allocation2 [shape = 'u8[4096]{0}', space=vmem, size = 0x1000, scoped, tag = 'input window, operand 0']
    #allocation3 [shape = 's32[2]{0}', space=sflag, size = 0x8, scoped, tag = 'scoped memory for tpu_custom_call.1']
    #allocation4 [shape = 's32[2]{0}', space=sflag, size = 0x8, scoped, tag = 'scoped memory for tpu_custom_call.1']
    #allocation5 [shape = 'u8[131072]{0}', space=vmem, size = 0x20000, scoped, tag = 'input window, operand 1, single buffered']
    #allocation6 [shape = 's32[1]{0}', space=sflag, size = 0x4, scoped, tag = 'scoped memory for tpu_custom_call.1']
    #allocation7 [shape = 'u8[2048]{0}', space=vmem, size = 0x800, scoped, tag = 'input window, operand 2, single buffered']
    #allocation8 [shape = 'u8[8192]{0}', space=vmem, size = 0x2000, scoped, tag = 'output window, operand 0']
    %8 = vsyncpa [#allocation3], 0
    %s9 = scalar_lea.sflag [#allocation3], 1
    %10 = vsyncpa %s9, 0
    %11 = vsyncpa [#allocation6], 0
    %12 = vsyncpa [#allocation4], 0
    %s13 = scalar_lea.sflag [#allocation4], 1
    %14 = vsyncpa %s13, 0
    loop: start=0, step=1, limit=6
    $region2: #{tpu_custom_call.1} parent=1 // loop_pre_header
      _
    $region3: #{tpu_custom_call.1} parent=1 // loop_header
      %s16 = sphi 0, %s20
      %p17 = scmp.ge.s32.totalorder %s16, 6
      %s26 = sphi 0, %s28
      %s29 = sphi 0, %s26
      %s30 = sphi 0, %s29
      %s46 = sphi 0, %s30
      %s50 = sphi 0, %s50
      %s52 = sphi 0, %s50
      %s53 = sphi 0, %s52
      %s67 = sphi 0, %s53
      %s71 = sphi 0, %s71
      %s73 = sphi 0, %s71
      %s74 = sphi 0, %s73
      %s88 = sphi 0, %s74
      %s94 = sphi 0, %s96
      %s97 = sphi 0, %s94
      %s98 = sphi 0, %s97
      %s114 = sphi 0, %s98
    $region4: #{tpu_custom_call.1} parent=1 // loop_header_branch
      %19 = sbr.rel (%p17) target = $region8
    $region5: #{tpu_custom_call.1} parent=1 // loop_body
      %s21 = ssub.s32 %s16, 1
      %s22 = ssub.s32 %s16, 2
      %s23 = sadd.s32 %s16, 1
      %s24 = ssub.s32 %s16, %s23
      %p25 = scmp.eq.s32.totalorder %s24, 0
      %s27 = sadd.s32 %s26, 1
      %s28 = scalar_select %p25, %s26, %s27
      %p31 = pneg %p25
      %p32 = scmp.eq.s32.totalorder %s16, 3
      %p33 = por %p31, %p32
      %p34 = scmp.ne.s32.totalorder %s26, %s29
      %p35 = scmp.eq.s32.totalorder %s16, 0
      %p36 = por %p34, %p35
      %p37 = scmp.ne.s32.totalorder %s26, %s29
      %p38 = scmp.eq.s32.totalorder %s21, 3
      %p39 = por %p37, %p38
      %p40 = scmp.ne.s32.totalorder %s29, %s30
      %p41 = scmp.eq.s32.totalorder %s21, 0
      %p42 = por %p40, %p41
      %p43 = scmp.ne.s32.totalorder %s29, %s30
      %p44 = scmp.eq.s32.totalorder %s22, 3
      %p45 = por %p43, %p44
      %p47 = scmp.ne.s32.totalorder %s30, %s46
      %p48 = scmp.eq.s32.totalorder %s22, 0
      %p49 = por %p47, %p48
      %s51 = sadd.s32 %s50, 1
      %p54 = scmp.eq.s32.totalorder %s16, 3
      %p55 = scmp.ne.s32.totalorder %s50, %s52
      %p56 = scmp.eq.s32.totalorder %s16, 0
      %p57 = por %p55, %p56
      %p58 = scmp.ne.s32.totalorder %s50, %s52
      %p59 = scmp.eq.s32.totalorder %s21, 3
      %p60 = por %p58, %p59
      %p61 = scmp.ne.s32.totalorder %s52, %s53
      %p62 = scmp.eq.s32.totalorder %s21, 0
      %p63 = por %p61, %p62
      %p64 = scmp.ne.s32.totalorder %s52, %s53
      %p65 = scmp.eq.s32.totalorder %s22, 3
      %p66 = por %p64, %p65
      %p68 = scmp.ne.s32.totalorder %s53, %s67
      %p69 = scmp.eq.s32.totalorder %s22, 0
      %p70 = por %p68, %p69
      %s72 = sadd.s32 %s71, 1
      %p75 = scmp.eq.s32.totalorder %s16, 3
      %p76 = scmp.ne.s32.totalorder %s71, %s73
      %p77 = scmp.eq.s32.totalorder %s16, 0
      %p78 = por %p76, %p77
      %p79 = scmp.ne.s32.totalorder %s71, %s73
      %p80 = scmp.eq.s32.totalorder %s21, 3
      %p81 = por %p79, %p80
      %p82 = scmp.ne.s32.totalorder %s73, %s74
      %p83 = scmp.eq.s32.totalorder %s21, 0
      %p84 = por %p82, %p83
      %p85 = scmp.ne.s32.totalorder %s73, %s74
      %p86 = scmp.eq.s32.totalorder %s22, 3
      %p87 = por %p85, %p86
      %p89 = scmp.ne.s32.totalorder %s74, %s88
      %p90 = scmp.eq.s32.totalorder %s22, 0
      %p91 = por %p89, %p90
      %s92 = ssub.s32 %s16, %s23
      %p93 = scmp.eq.s32.totalorder %s92, 0
      %s95 = sadd.s32 %s94, 1
      %s96 = scalar_select %p93, %s94, %s95
      %p99 = pneg %p93
      %p100 = scmp.eq.s32.totalorder %s16, 3
      %p101 = por %p99, %p100
      %p102 = scmp.ne.s32.totalorder %s94, %s97
      %p103 = scmp.eq.s32.totalorder %s16, 0
      %p104 = por %p102, %p103
      %p105 = scmp.ne.s32.totalorder %s94, %s97
      %p106 = scmp.eq.s32.totalorder %s21, 3
      %p107 = por %p105, %p106
      %p108 = scmp.ne.s32.totalorder %s97, %s98
      %p109 = scmp.eq.s32.totalorder %s21, 0
      %p110 = por %p108, %p109
      %p111 = scmp.ne.s32.totalorder %s97, %s98
      %p112 = scmp.eq.s32.totalorder %s22, 3
      %p113 = por %p111, %p112
      %p115 = scmp.ne.s32.totalorder %s98, %s114
      %p116 = scmp.eq.s32.totalorder %s22, 0
      %p117 = por %p115, %p116
      %p118 = scmp.le.s32.totalorder 1, %s16
      %p119 = scmp.lt.s32.totalorder %s16, 5
      %p120 = pnand %p118, %p119
      %p121 = pneg %p120
      // Predicated region
      $region9: #{tpu_custom_call.1} parent=5 // pred_check
        _
      $region10: #{tpu_custom_call.1} parent=5 // pred_check_branch
        %123 = sbr.rel (%p120) target = $region12
      $region11: #{tpu_custom_call.1} parent=5 // pred_region
        %s124 = ssub.s32 %s16, 1
        // Predicated region
        $region13: #{tpu_custom_call.1} parent=11 // pred_check
          %p125 = pneg %p63
        $region14: #{tpu_custom_call.1} parent=11 // pred_check_branch
          %127 = sbr.rel (%p125) target = $region16
        $region15: #{tpu_custom_call.1} parent=11 // pred_region
          %s129 = ssub.s32 4096, 4096
          %130 = vsyncadd [#allocation6], %s129
          %s131 = sshll.u32 [#allocation5], 4
          %s132 = int_to_ptr.vmem [resolvable:$true] %s131
          %137 = dma.hbm_to_vmem [thread:$0]  %s1, 4096, %s132, [#allocation6], 256, 256, 16
        $region16: #{tpu_custom_call.1} parent=11 // pred_fallthru
          _
        // Predicated region
        $region17: #{tpu_custom_call.1} parent=11 // pred_check
          %p138 = pneg %p84
        $region18: #{tpu_custom_call.1} parent=11 // pred_check_branch
          %140 = sbr.rel (%p138) target = $region20
        $region19: #{tpu_custom_call.1} parent=11 // pred_region
          %s142 = ssub.s32 64, 64
          %143 = vsyncadd [#allocation6], %s142
          %s145 = sshll.u32 [#allocation7], 4
          %s146 = int_to_ptr.vmem [resolvable:$true] %s145
          %148 = dma.hbm_to_vmem [thread:$0]  %s2, 64, %s146, [#allocation6]
        $region20: #{tpu_custom_call.1} parent=11 // pred_fallthru
          _
      $region12: #{tpu_custom_call.1} parent=5 // pred_fallthru
        _
      %p149 = scmp.lt.s32.totalorder %s16, 4
      // Predicated region
      $region21: #{tpu_custom_call.1} parent=5 // pred_check
        %p150 = pneg %p149
      $region22: #{tpu_custom_call.1} parent=5 // pred_check_branch
        %152 = sbr.rel (%p150) target = $region24
      $region23: #{tpu_custom_call.1} parent=5 // pred_region
        // Predicated region
        $region25: #{tpu_custom_call.1} parent=23 // pred_check
          %p153 = pneg %p36
        $region26: #{tpu_custom_call.1} parent=23 // pred_check_branch
          %155 = sbr.rel (%p153) target = $region28
        $region27: #{tpu_custom_call.1} parent=23 // pred_region
          %s156 = sand.u32 %s26, 1
          %s157 = scalar_lea.sflag [#allocation3], %s156
          %s158 = sand.u32 %s26, 1
          %s159 = smul.addr %s158, 4
          %s160 = scalar_lea.vmem [#allocation2], %s159
          %s162 = ssub.s32 64, 64
          %163 = vsyncadd %s157, %s162
          %s164 = smul.addr %s16, 64
          %s165 = scalar_lea.hbm %s0, %s164
          %s167 = sshll.u32 %s160, 4
          %s168 = int_to_ptr.vmem [resolvable:$true] %s167
          %170 = dma.hbm_to_vmem [thread:$0]  %s165, 64, %s168, %s157
        $region28: #{tpu_custom_call.1} parent=23 // pred_fallthru
          _
      $region24: #{tpu_custom_call.1} parent=5 // pred_fallthru
        _
      %p171 = scmp.le.s32.totalorder 1, %s16
      %p172 = scmp.lt.s32.totalorder %s16, 5
      %p173 = pnand %p171, %p172
      %p174 = pneg %p173
      // Predicated region
      $region29: #{tpu_custom_call.1} parent=5 // pred_check
        _
      $region30: #{tpu_custom_call.1} parent=5 // pred_check_branch
        %176 = sbr.rel (%p173) target = $region32
      $region31: #{tpu_custom_call.1} parent=5 // pred_region
        %s177 = ssub.s32 %s16, 1
        %s178 = sand.u32 %s29, 1
        %s179 = scalar_lea.sflag [#allocation3], %s178
        %s180 = sand.u32 %s29, 1
        %s181 = smul.addr %s180, 4
        %s182 = scalar_lea.vmem [#allocation2], %s181
        // Predicated region
        $region33: #{tpu_custom_call.1} parent=31 // pred_check
          %p183 = pneg %p42
        $region34: #{tpu_custom_call.1} parent=31 // pred_check_branch
          %185 = sbr.rel (%p183) target = $region36
        $region35: #{tpu_custom_call.1} parent=31 // pred_region
          %186 = dma.done %s179, 64
        $region36: #{tpu_custom_call.1} parent=31 // pred_fallthru
          _
        // Predicated region
        $region37: #{tpu_custom_call.1} parent=31 // pred_check
          %p187 = pneg %p63
        $region38: #{tpu_custom_call.1} parent=31 // pred_check_branch
          %189 = sbr.rel (%p187) target = $region40
        $region39: #{tpu_custom_call.1} parent=31 // pred_region
          %190 = dma.done [#allocation6], 4096
        $region40: #{tpu_custom_call.1} parent=31 // pred_fallthru
          _
        // Predicated region
        $region41: #{tpu_custom_call.1} parent=31 // pred_check
          %p191 = pneg %p84
        $region42: #{tpu_custom_call.1} parent=31 // pred_check_branch
          %193 = sbr.rel (%p191) target = $region44
        $region43: #{tpu_custom_call.1} parent=31 // pred_region
          %194 = dma.done [#allocation6], 64
        $region44: #{tpu_custom_call.1} parent=31 // pred_fallthru
          _
        %s195 = sand.u32 %s29, 1
        %s196 = scalar_lea.sflag [#allocation3], %s195
        %s197 = sand.u32 %s29, 1
        %s198 = smul.addr %s197, 4
        %s199 = scalar_lea.vmem [#allocation2], %s198
        %p200 = pneg %p42
        %p201 = pneg %p39
        %p202 = pneg %p63
        %p203 = pneg %p60
        %p204 = pneg %p84
        %p205 = pneg %p81
        %p206 = pneg %p110
        %p207 = pneg %p107
        %s208 = sand.u32 %s97, 1
        %s209 = scalar_lea.sflag [#allocation4], %s208
        %s210 = sand.u32 %s97, 1
        %s211 = smul.addr %s210, 8
        %s212 = scalar_lea.vmem [#allocation8], %s211
        %v214 = vld [vmem:[%s182] sm:$0xf]
        %v215 = vld [vmem:[#allocation5] sm:$0xff]
        %v216 = vld [vmem:[#allocation5 + $0x8] sm:$0xff]
        %v217 = vld [vmem:[#allocation5 + $0x10] sm:$0xff]
        %v218 = vld [vmem:[#allocation5 + $0x18] sm:$0xff]
        %v219 = vld [vmem:[#allocation5 + $0x20] sm:$0xff]
        %v220 = vld [vmem:[#allocation5 + $0x28] sm:$0xff]
        %v221 = vld [vmem:[#allocation5 + $0x30] sm:$0xff]
        %v222 = vld [vmem:[#allocation5 + $0x38] sm:$0xff]
        %v223 = vld [vmem:[#allocation5 + $0x40] sm:$0xff]
        %v224 = vld [vmem:[#allocation5 + $0x48] sm:$0xff]
        %v225 = vld [vmem:[#allocation5 + $0x50] sm:$0xff]
        %v226 = vld [vmem:[#allocation5 + $0x58] sm:$0xff]
        %v227 = vld [vmem:[#allocation5 + $0x60] sm:$0xff]
        %v228 = vld [vmem:[#allocation5 + $0x68] sm:$0xff]
        %v229 = vld [vmem:[#allocation5 + $0x70] sm:$0xff]
        %v230 = vld [vmem:[#allocation5 + $0x78] sm:$0xff]
        %v231 = vld [vmem:[#allocation5 + $0x80] sm:$0xff]
        %v232 = vld [vmem:[#allocation5 + $0x88] sm:$0xff]
        %v233 = vld [vmem:[#allocation5 + $0x90] sm:$0xff]
        %v234 = vld [vmem:[#allocation5 + $0x98] sm:$0xff]
        %v235 = vld [vmem:[#allocation5 + $0xa0] sm:$0xff]
        %v236 = vld [vmem:[#allocation5 + $0xa8] sm:$0xff]
        %v237 = vld [vmem:[#allocation5 + $0xb0] sm:$0xff]
        %v238 = vld [vmem:[#allocation5 + $0xb8] sm:$0xff]
        %v239 = vld [vmem:[#allocation5 + $0xc0] sm:$0xff]
        %v240 = vld [vmem:[#allocation5 + $0xc8] sm:$0xff]
        %v241 = vld [vmem:[#allocation5 + $0xd0] sm:$0xff]
        %v242 = vld [vmem:[#allocation5 + $0xd8] sm:$0xff]
        %v243 = vld [vmem:[#allocation5 + $0xe0] sm:$0xff]
        %v244 = vld [vmem:[#allocation5 + $0xe8] sm:$0xff]
        %v245 = vld [vmem:[#allocation5 + $0xf0] sm:$0xff]
        %v246 = vld [vmem:[#allocation5 + $0xf8] sm:$0xff]
        %v247 = vld [vmem:[#allocation7] sm:$0xf]
        %v249 = vlaneseq
        %v250 = vshrl.u32 %v249, 7
        %v251 = vsub.s32 0, %v250
        %v252 = vrot.slane %v247, %v251
        %v253 = vlaneseq
        %v254 = vshrl.u32 %v253, 7
        %v255 = vsub.s32 1, %v254
        %v256 = vrot.slane %v247, %v255
        %v257 = vlaneseq
        %v258 = vshrl.u32 %v257, 7
        %v259 = vsub.s32 2, %v258
        %v260 = vrot.slane %v247, %v259
        %v261 = vlaneseq
        %v262 = vshrl.u32 %v261, 7
        %v263 = vsub.s32 3, %v262
        %v264 = vrot.slane %v247, %v263
        %v301 = vunpack.c.l.b16 %v215
        %v302 = vunpack.c.h.b16 %v215
        %v303 = vunpack.c.l.b16 %v216
        %v304 = vunpack.c.h.b16 %v216
        %v305 = vunpack.c.l.b16 %v217
        %v306 = vunpack.c.h.b16 %v217
        %v307 = vunpack.c.l.b16 %v218
        %v308 = vunpack.c.h.b16 %v218
        %v309 = vunpack.c.l.b16 %v219
        %v310 = vunpack.c.h.b16 %v219
        %v311 = vunpack.c.l.b16 %v220
        %v312 = vunpack.c.h.b16 %v220
        %v313 = vunpack.c.l.b16 %v221
        %v314 = vunpack.c.h.b16 %v221
        %v315 = vunpack.c.l.b16 %v222
        %v316 = vunpack.c.h.b16 %v222
        %v317 = vunpack.c.l.b16 %v223
        %v318 = vunpack.c.h.b16 %v223
        %v319 = vunpack.c.l.b16 %v224
        %v320 = vunpack.c.h.b16 %v224
        %v321 = vunpack.c.l.b16 %v225
        %v322 = vunpack.c.h.b16 %v225
        %v323 = vunpack.c.l.b16 %v226
        %v324 = vunpack.c.h.b16 %v226
        %v325 = vunpack.c.l.b16 %v227
        %v326 = vunpack.c.h.b16 %v227
        %v327 = vunpack.c.l.b16 %v228
        %v328 = vunpack.c.h.b16 %v228
        %v329 = vunpack.c.l.b16 %v229
        %v330 = vunpack.c.h.b16 %v229
        %v331 = vunpack.c.l.b16 %v230
        %v332 = vunpack.c.h.b16 %v230
        %v333 = vunpack.c.l.b16 %v231
        %v334 = vunpack.c.h.b16 %v231
        %v335 = vunpack.c.l.b16 %v232
        %v336 = vunpack.c.h.b16 %v232
        %v337 = vunpack.c.l.b16 %v233
        %v338 = vunpack.c.h.b16 %v233
        %v339 = vunpack.c.l.b16 %v234
        %v340 = vunpack.c.h.b16 %v234
        %v341 = vunpack.c.l.b16 %v235
        %v342 = vunpack.c.h.b16 %v235
        %v343 = vunpack.c.l.b16 %v236
        %v344 = vunpack.c.h.b16 %v236
        %v345 = vunpack.c.l.b16 %v237
        %v346 = vunpack.c.h.b16 %v237
        %v347 = vunpack.c.l.b16 %v238
        %v348 = vunpack.c.h.b16 %v238
        %v349 = vunpack.c.l.b16 %v239
        %v350 = vunpack.c.h.b16 %v239
        %v351 = vunpack.c.l.b16 %v240
        %v352 = vunpack.c.h.b16 %v240
        %v353 = vunpack.c.l.b16 %v241
        %v354 = vunpack.c.h.b16 %v241
        %v355 = vunpack.c.l.b16 %v242
        %v356 = vunpack.c.h.b16 %v242
        %v357 = vunpack.c.l.b16 %v243
        %v358 = vunpack.c.h.b16 %v243
        %v359 = vunpack.c.l.b16 %v244
        %v360 = vunpack.c.h.b16 %v244
        %v361 = vunpack.c.l.b16 %v245
        %v362 = vunpack.c.h.b16 %v245
        %v363 = vunpack.c.l.b16 %v246
        %v364 = vunpack.c.h.b16 %v246
        %v365 = vpack.c.b16 %v305, %v301
        %v366 = vpack.c.b16 %v306, %v302
        %v367 = vpack.c.b16 %v307, %v303
        %v368 = vpack.c.b16 %v308, %v304
        %v369 = vpack.c.b16 %v313, %v309
        %v370 = vpack.c.b16 %v314, %v310
        %v371 = vpack.c.b16 %v315, %v311
        %v372 = vpack.c.b16 %v316, %v312
        %v373 = vpack.c.b16 %v321, %v317
        %v374 = vpack.c.b16 %v322, %v318
        %v375 = vpack.c.b16 %v323, %v319
        %v376 = vpack.c.b16 %v324, %v320
        %v377 = vpack.c.b16 %v329, %v325
        %v378 = vpack.c.b16 %v330, %v326
        %v379 = vpack.c.b16 %v331, %v327
        %v380 = vpack.c.b16 %v332, %v328
        %v381 = vpack.c.b16 %v337, %v333
        %v382 = vpack.c.b16 %v338, %v334
        %v383 = vpack.c.b16 %v339, %v335
        %v384 = vpack.c.b16 %v340, %v336
        %v385 = vpack.c.b16 %v345, %v341
        %v386 = vpack.c.b16 %v346, %v342
        %v387 = vpack.c.b16 %v347, %v343
        %v388 = vpack.c.b16 %v348, %v344
        %v389 = vpack.c.b16 %v353, %v349
        %v390 = vpack.c.b16 %v354, %v350
        %v391 = vpack.c.b16 %v355, %v351
        %v392 = vpack.c.b16 %v356, %v352
        %v393 = vpack.c.b16 %v361, %v357
        %v394 = vpack.c.b16 %v362, %v358
        %v395 = vpack.c.b16 %v363, %v359
        %v396 = vpack.c.b16 %v364, %v360
        %429 = vmatprep.subr.bf16.mxu0 %v394
        %430 = vmatpush1.bf16.msra.mxu0 %v393
        %431 = vmatprep.subr.bf16.mxu0 %v390
        %432 = vmatpush1.bf16.msra.mxu0 %v389
        %433 = vmatprep.subr.bf16.mxu0 %v386
        %434 = vmatpush1.bf16.msra.mxu0 %v385
        %435 = vmatprep.subr.bf16.mxu0 %v382
        %436 = vmatpush1.bf16.msra.mxu0 %v381
        %437 = vmatprep.subr.bf16.mxu0 %v378
        %438 = vmatpush1.bf16.msra.mxu0 %v377
        %439 = vmatprep.subr.bf16.mxu0 %v374
        %440 = vmatpush1.bf16.msra.mxu0 %v373
        %441 = vmatprep.subr.bf16.mxu0 %v370
        %442 = vmatpush1.bf16.msra.mxu0 %v369
        %443 = vmatprep.subr.bf16.mxu0 %v366
        %444 = vmatpush1.bf16.msra.mxu0 %v365
        %445 = vmatprep.subr.bf16.mxu0 0
        %446 = vmatpush2.bf16.msra.mxu0 0
        %447 = vmatprep.subr.bf16.mxu0 0
        %448 = vmatpush2.bf16.msra.mxu0 0
        %449 = vmatprep.subr.bf16.mxu0 0
        %450 = vmatpush2.bf16.msra.mxu0 0
        %451 = vmatprep.subr.bf16.mxu0 0
        %452 = vmatpush2.bf16.msra.mxu0 0
        %453 = vmatprep.subr.bf16.mxu0 0
        %454 = vmatpush2.bf16.msra.mxu0 0
        %455 = vmatprep.subr.bf16.mxu0 0
        %456 = vmatpush2.bf16.msra.mxu0 0
        %457 = vmatprep.subr.bf16.mxu0 0
        %458 = vmatpush2.bf16.msra.mxu0 0
        %459 = vmatprep.subr.bf16.mxu0 0
        %460 = vmatpush2.bf16.msra.mxu0 0
        %461 = vmatprep.mubr.bf16.mxu0 0
        %462 = vmatmul.mubr.bf16.gmra.mxu0 %v214
        %v463 = vpop.f32.mrf.mxu0
        %v464 = vadd.f32 %v252, %v463
        %v465 = vpop.f32.mrf.mxu0
        %v466 = vadd.f32 %v256, %v465
        %v467 = vpop.f32.mrf.mxu0
        %v468 = vpop.f32.mrf.mxu0
        %469 = vdwg.mxu0
        %470 = vmatprep.subr.bf16.mxu0 %v396
        %471 = vmatpush1.bf16.msra.mxu0 %v395
        %472 = vmatprep.subr.bf16.mxu0 %v392
        %473 = vmatpush1.bf16.msra.mxu0 %v391
        %474 = vmatprep.subr.bf16.mxu0 %v388
        %475 = vmatpush1.bf16.msra.mxu0 %v387
        %476 = vmatprep.subr.bf16.mxu0 %v384
        %477 = vmatpush1.bf16.msra.mxu0 %v383
        %478 = vmatprep.subr.bf16.mxu0 %v380
        %479 = vmatpush1.bf16.msra.mxu0 %v379
        %480 = vmatprep.subr.bf16.mxu0 %v376
        %481 = vmatpush1.bf16.msra.mxu0 %v375
        %482 = vmatprep.subr.bf16.mxu0 %v372
        %483 = vmatpush1.bf16.msra.mxu0 %v371
        %484 = vmatprep.subr.bf16.mxu0 %v368
        %485 = vmatpush1.bf16.msra.mxu0 %v367
        %486 = vmatprep.subr.bf16.mxu0 0
        %487 = vmatpush2.bf16.msra.mxu0 0
        %488 = vmatprep.subr.bf16.mxu0 0
        %489 = vmatpush2.bf16.msra.mxu0 0
        %490 = vmatprep.subr.bf16.mxu0 0
        %491 = vmatpush2.bf16.msra.mxu0 0
        %492 = vmatprep.subr.bf16.mxu0 0
        %493 = vmatpush2.bf16.msra.mxu0 0
        %494 = vmatprep.subr.bf16.mxu0 0
        %495 = vmatpush2.bf16.msra.mxu0 0
        %496 = vmatprep.subr.bf16.mxu0 0
        %497 = vmatpush2.bf16.msra.mxu0 0
        %498 = vmatprep.subr.bf16.mxu0 0
        %499 = vmatpush2.bf16.msra.mxu0 0
        %500 = vmatprep.subr.bf16.mxu0 0
        %501 = vmatpush2.bf16.msra.mxu0 0
        %502 = vmatprep.mubr.bf16.mxu0 0
        %503 = vmatmul.mubr.bf16.gmra.mxu0 %v214
        %v504 = vpop.f32.mrf.mxu0
        %v505 = vadd.f32 %v260, %v504
        %v506 = vpop.f32.mrf.mxu0
        %v507 = vadd.f32 %v264, %v506
        %v508 = vpop.f32.mrf.mxu0
        %v509 = vpop.f32.mrf.mxu0
        %510 = vdwg.mxu0
        %v511 = vmax.f32 %v464, 0.0
        %v512 = vmax.f32 %v466, 0.0
        %v513 = vmax.f32 %v505, 0.0
        %v514 = vmax.f32 %v507, 0.0
        %v515 = vrot.slane %v511, 4
        %v516 = vadd.f32 %v511, %v515
        %v517 = vrot.slane %v516, 2
        %v518 = vadd.f32 %v516, %v517
        %v519 = vrot.slane %v518, 1
        %v520 = vadd.f32 %v518, %v519
        %v521 = vrot.slane %v512, 4
        %v522 = vadd.f32 %v512, %v521
        %v523 = vrot.slane %v522, 2
        %v524 = vadd.f32 %v522, %v523
        %v525 = vrot.slane %v524, 1
        %v526 = vadd.f32 %v524, %v525
        %v527 = vrot.slane %v513, 4
        %v528 = vadd.f32 %v513, %v527
        %v529 = vrot.slane %v528, 2
        %v530 = vadd.f32 %v528, %v529
        %v531 = vrot.slane %v530, 1
        %v532 = vadd.f32 %v530, %v531
        %v533 = vrot.slane %v514, 4
        %v534 = vadd.f32 %v514, %v533
        %v535 = vrot.slane %v534, 2
        %v536 = vadd.f32 %v534, %v535
        %v537 = vrot.slane %v536, 1
        %v538 = vadd.f32 %v536, %v537
        %v539 = vmul.f32 %v511, %v511
        %v540 = vmul.f32 %v512, %v512
        %v541 = vmul.f32 %v513, %v513
        %v542 = vmul.f32 %v514, %v514
        %v543 = vrot.slane %v539, 4
        %v544 = vadd.f32 %v539, %v543
        %v545 = vrot.slane %v544, 2
        %v546 = vadd.f32 %v544, %v545
        %v547 = vrot.slane %v546, 1
        %v548 = vadd.f32 %v546, %v547
        %v549 = vrot.slane %v540, 4
        %v550 = vadd.f32 %v540, %v549
        %v551 = vrot.slane %v550, 2
        %v552 = vadd.f32 %v550, %v551
        %v553 = vrot.slane %v552, 1
        %v554 = vadd.f32 %v552, %v553
        %v555 = vrot.slane %v541, 4
        %v556 = vadd.f32 %v541, %v555
        %v557 = vrot.slane %v556, 2
        %v558 = vadd.f32 %v556, %v557
        %v559 = vrot.slane %v558, 1
        %v560 = vadd.f32 %v558, %v559
        %v561 = vrot.slane %v542, 4
        %v562 = vadd.f32 %v542, %v561
        %v563 = vrot.slane %v562, 2
        %v564 = vadd.f32 %v562, %v563
        %v565 = vrot.slane %v564, 1
        %v566 = vadd.f32 %v564, %v565
        %vm567 = vcmask 1040384
        %v568 = vsel %vm567, %v520, %v548
        %v569 = vsel %vm567, %v526, %v554
        %v570 = vsel %vm567, %v532, %v560
        %v571 = vsel %vm567, %v538, %v566
        %v576 = vcombine.low %v568, %v569
        %v577 = vcombine.low %v570, %v571
        %v579 = vunpack.c.l.s4 1983009808
        %v580 = vunpack.c.0.s8 %v579
        %v581 = vlaneseq
        %v582 = vshrl.u32 %v581, 7
        %v583 = vsub.s32 %v580, %v582
        %v584 = vrot.slane %v576, %v583
        %v586 = vunpack.c.l.s4 1983009808
        %v587 = vunpack.c.0.s8 %v586
        %v588 = vlaneseq
        %v589 = vshrl.u32 %v588, 7
        %v590 = vsub.s32 %v587, %v589
        %v591 = vrot.slane %v577, %v590
        %v592 = vcombine.low %v584, %v591
        %594 = vst [vmem:[%s212] sm:$0xff] %v592
        %s595 = sand.u32 %s97, 1
        %s596 = scalar_lea.sflag [#allocation4], %s595
        %s597 = sand.u32 %s97, 1
        %s598 = smul.addr %s597, 8
        %s599 = scalar_lea.vmem [#allocation8], %s598
        // Predicated region
        $region45: #{tpu_custom_call.1} parent=31 // pred_check
          %p600 = pneg %p107
        $region46: #{tpu_custom_call.1} parent=31 // pred_check_branch
          %602 = sbr.rel (%p600) target = $region48
        $region47: #{tpu_custom_call.1} parent=31 // pred_region
          %s604 = ssub.s32 128, 128
          %605 = vsyncadd %s596, %s604
          %s606 = smul.addr %s21, 4
          %s607 = smul.addr %s606, 32
          %s608 = scalar_lea.hbm %s3, %s607
          %s610 = sshll.u32 %s599, 4
          %s611 = int_to_ptr.vmem [resolvable:$true] %s610
          %613 = dma.vmem_to_hbm [thread:$0]  %s611, 128, %s608, %s596
        $region48: #{tpu_custom_call.1} parent=31 // pred_fallthru
          _
      $region32: #{tpu_custom_call.1} parent=5 // pred_fallthru
        _
      %p614 = scmp.le.s32.totalorder 2, %s16
      // Predicated region
      $region49: #{tpu_custom_call.1} parent=5 // pred_check
        %p615 = pneg %p614
      $region50: #{tpu_custom_call.1} parent=5 // pred_check_branch
        %617 = sbr.rel (%p615) target = $region52
      $region51: #{tpu_custom_call.1} parent=5 // pred_region
        %s618 = ssub.s32 %s16, 2
        // Predicated region
        $region53: #{tpu_custom_call.1} parent=51 // pred_check
          %p619 = pneg %p113
        $region54: #{tpu_custom_call.1} parent=51 // pred_check_branch
          %621 = sbr.rel (%p619) target = $region56
        $region55: #{tpu_custom_call.1} parent=51 // pred_region
          %s622 = sand.u32 %s98, 1
          %s623 = scalar_lea.sflag [#allocation4], %s622
          %s624 = sand.u32 %s98, 1
          %s625 = smul.addr %s624, 8
          %s626 = scalar_lea.vmem [#allocation8], %s625
          %627 = dma.done %s623, 128
        $region56: #{tpu_custom_call.1} parent=51 // pred_fallthru
          _
      $region52: #{tpu_custom_call.1} parent=5 // pred_fallthru
        _
    $region6: #{tpu_custom_call.1} parent=1 // loop_footer
      %s20 = sadd.s32 1, %s16
    $region7: #{tpu_custom_call.1} parent=1 // loop_footer_branch
      %15 = sbr.rel target = $region3
    $region8: #{tpu_custom_call.1} parent=1 // loop_exit
      _
    %628 = vsyncpa [#allocation3], 1
    %s629 = scalar_lea.sflag [#allocation3], 1
    %630 = vsyncpa %s629, 1
    %631 = vsyncpa [#allocation6], 1
    %632 = vsyncpa [#allocation4], 1
    %s633 = scalar_lea.sflag [#allocation4], 1
    %634 = vsyncpa %s633, 1

</llo_original>
